<compile_context>
chip_gen: v6e
topology: v6e:2x2x1
jax: 0.10.0
libtpu: 0.0.40
codegen_flags: <defaults>
</compile_context>

<pallas_src>
import functools

import jax
import jax.numpy as jnp
from jax.experimental import pallas as pl
from jax.experimental.pallas import tpu as pltpu

_LANE = 128
_MAX_TR = 2048   # max sublane rows per block: 2048x128 f32 = 1 MiB per input block


def _choose_tiling(hw):
    """Tile the flattened spatial axis into (TR rows of 128 lanes) x n_tiles."""
    r0 = -(-hw // _LANE)                 # rows of 128 needed
    if r0 <= _MAX_TR:
        # Single tile per (class, batch); sublane dim == full array dim is legal
        # even when it is not a multiple of 8, and no row padding is needed.
        return r0, 1
    n_tiles = -(-r0 // _MAX_TR)
    tr = -(-r0 // n_tiles)
    tr = ((tr + 7) // 8) * 8             # multiple of 8 so (TR, 128) tiles are aligned
    return tr, n_tiles


def _focal_kernel(pred_ref, tgt_ref, out_ref, acc_ref, *, gamma, alpha):
    b = pl.program_id(1)
    j = pl.program_id(2)

    @pl.when((b == 0) & (j == 0))
    def _init():
        acc_ref[...] = jnp.zeros_like(acc_ref)

    x = pred_ref[...].astype(jnp.float32)     # (TR, LANE)
    t = tgt_ref[...].astype(jnp.float32)

    # One shared transcendental: e = exp(-|x|) feeds both sigmoid and log1p.
    e = jnp.exp(-jnp.abs(x))
    d = 1.0 + e
    r = pl.reciprocal(d, approx=True)
    r = r * (2.0 - d * r)                     # one Newton step -> ~f32-exact 1/(1+e)
    p = jnp.where(x >= 0, r, 1.0 - r)         # sigmoid(x)
    # numerically stable binary_cross_entropy_with_logits (reduction='none')
    ce = jnp.maximum(x, 0.0) - x * t + jnp.log1p(e)

    one_minus_pt = p + t - 2.0 * p * t        # == 1 - (p*t + (1-p)*(1-t))
    g = float(gamma)
    if g == int(g) and 0 <= int(g) <= 8:
        w = jnp.ones_like(one_minus_pt)
        for _ in range(int(g)):
            w = w * one_minus_pt
    else:
        w = one_minus_pt ** g
    loss = ce * w
    if alpha >= 0:
        loss = (alpha * t + (1.0 - alpha) * (1.0 - t)) * loss

    # Element-wise accumulation rides idle VPU slots; no per-step XLU reduce.
    acc_ref[...] += loss

    @pl.when((b == pl.num_programs(1) - 1) & (j == pl.num_programs(2) - 1))
    def _finalize():
        # Single sublane reduce per class, written to a lane-dense (1, 128) block.
        out_ref[...] = jnp.sum(acc_ref[...], axis=0, keepdims=True)


def focal_loss_bev(pred, target, map_classes, *, alpha=-1.0, gamma=2.0,
                   reduction="mean"):
    """pred, target: (B, C, H, W).  Returns {f'{name}/focal': scalar loss}."""
    assert pred.shape == target.shape and pred.ndim == 4
    B, C, H, W = pred.shape
    assert C == len(map_classes)
    hw = H * W
    n = B * hw

    TR, n_tiles = _choose_tiling(hw)
    rows = TR * n_tiles
    hw_pad = rows * _LANE

    # Free reshape of the contiguous NCHW layout; no transpose, no dtype cast.
    pred_f = pred.reshape(B, C, hw)
    tgt_f = target.reshape(B, C, hw)
    if hw_pad != hw:
        pad = hw_pad - hw
        # (+100 logit, target=1) -> exactly zero focal loss for padded elements.
        pred_f = jnp.pad(pred_f, ((0, 0), (0, 0), (0, pad)), constant_values=100.0)
        tgt_f = jnp.pad(tgt_f, ((0, 0), (0, 0), (0, pad)), constant_values=1.0)
    pred_4d = pred_f.reshape(B, C, rows, _LANE)
    tgt_4d = tgt_f.reshape(B, C, rows, _LANE)

    kernel = functools.partial(_focal_kernel, gamma=float(gamma), alpha=float(alpha))

    out = pl.pallas_call(
        kernel,
        out_shape=jax.ShapeDtypeStruct((C, 1, _LANE), jnp.float32),
        grid_spec=pltpu.PrefetchScalarGridSpec(
            num_scalar_prefetch=0,
            grid=(C, B, n_tiles),
            in_specs=[
                pl.BlockSpec((None, None, TR, _LANE), lambda c, b, j: (b, c, j, 0)),
                pl.BlockSpec((None, None, TR, _LANE), lambda c, b, j: (b, c, j, 0)),
            ],
            out_specs=pl.BlockSpec((None, 1, _LANE), lambda c, b, j: (c, 0, 0)),
            scratch_shapes=[pltpu.VMEM((TR, _LANE), jnp.float32)],
        ),
        compiler_params=pltpu.CompilerParams(
            dimension_semantics=("parallel", "arbitrary", "arbitrary")),
    )(pred_4d, tgt_4d)

    per_class_sum = jnp.sum(out[:, 0, :], axis=-1)   # (C,) tiny host-side lane reduce
    if reduction == "mean":
        per_class = per_class_sum / jnp.float32(n)
    elif reduction == "sum":
        per_class = per_class_sum
    else:
        # TODO(synk): reduction='none' (full-resolution loss map) not supported by this sum-output kernel
        raise NotImplementedError("reduction='none' is not implemented")

    return {f"{name}/focal": per_class[i] for i, name in enumerate(map_classes)}


def _reference_focal(pred_c, tgt_c, alpha, gamma):
    x = pred_c.astype(jnp.float32)
    t = tgt_c.astype(jnp.float32)
    p = jax.nn.sigmoid(x)
    ce = jnp.maximum(x, 0.0) - x * t + jnp.log1p(jnp.exp(-jnp.abs(x)))
    p_t = p * t + (1.0 - p) * (1.0 - t)
    loss = ce * (1.0 - p_t) ** gamma
    if alpha >= 0:
        loss = (alpha * t + (1.0 - alpha) * (1.0 - t)) * loss
    return loss.mean()


def _run_case(key, shape, map_classes, alpha, gamma):
    k_pred, k_tgt = jax.random.split(key)
    B, C, H, W = shape
    pred = jax.random.normal(k_pred, (B, C, H, W), dtype=jnp.float32) * 2.0
    target = (jax.random.uniform(k_tgt, (B, C, H, W)) > 0.5).astype(jnp.float32)

    losses = focal_loss_bev(pred, target, map_classes, alpha=alpha, gamma=gamma,
                            reduction="mean")
    losses = jax.tree_util.tree_map(jax.block_until_ready, losses)

    ok = True
    for i, name in enumerate(map_classes):
        ref = _reference_focal(pred[:, i], target[:, i], alpha=alpha, gamma=gamma)
        got = losses[f"{name}/focal"]
        if not jnp.allclose(got, ref, rtol=1e-4, atol=1e-6):
            ok = False
            print(f"MISMATCH {name} (alpha={alpha}): kernel={got} ref={ref}")
    return ok


if __name__ == "__main__":
    key = jax.random.PRNGKey(0)
    k1, k2 = jax.random.split(key)
    map_classes = ["drivable_area", "ped_crossing", "walkway", "divider"]

    ok = True
    # Aligned spatial size, default alpha (no alpha weighting).
    ok &= _run_case(k1, (2, 4, 16, 16), map_classes, alpha=-1.0, gamma=2.0)
    # Ragged spatial size (exercises the zero-contribution padding) + alpha path.
    ok &= _run_case(k2, (2, 4, 15, 15), map_classes, alpha=0.25, gamma=2.0)

    if ok:
        print("KERNEL_OK")
</pallas_src>

<mosaic_0001>
module attributes {stable_mosaic.version = 11 : i64} {
  func.func @_focal_kernel(%arg0: i32, %arg1: i32, %arg2: i32, %arg3: memref<1x1x2x128xf32, #tpu.memory_space<vmem>>, %arg4: memref<1x1x2x128xf32, #tpu.memory_space<vmem>>, %arg5: memref<1x1x128xf32, #tpu.memory_space<vmem>>, %arg6: memref<2x128xf32, #tpu.memory_space<vmem>>) attributes {dimension_semantics = [#tpu.dimension_semantics<parallel>, #tpu.dimension_semantics<arbitrary>, #tpu.dimension_semantics<arbitrary>], iteration_bounds = array<i64: 4, 2, 1>, scalar_prefetch = 0 : i64, scratch_operands = 1 : i64, tpu.core_type = #tpu.core_type<tc>, window_params = [{transform_indices = @transform_0, window_bounds = array<i64: 1, 1, 2, 128>}, {transform_indices = @transform_1, window_bounds = array<i64: 1, 1, 2, 128>}, {transform_indices = @transform_2, window_bounds = array<i64: 1, 1, 128>}]} {
    %c0_i32 = arith.constant 0 : i32
    %0 = arith.cmpi eq, %arg1, %c0_i32 : i32
    %c0_i32_0 = arith.constant 0 : i32
    %1 = arith.cmpi eq, %arg2, %c0_i32_0 : i32
    %2 = arith.andi %0, %1 : i1
    %3 = arith.extui %2 : i1 to i32
    %c0_i32_1 = arith.constant 0 : i32
    %4 = arith.cmpi ne, %3, %c0_i32_1 : i32
    scf.if %4 {
      %cst_22 = arith.constant 0.000000e+00 : f32
      %48 = vector.broadcast %cst_22 : f32 to vector<2x128xf32>
      %c0_23 = arith.constant 0 : index
      %c0_24 = arith.constant 0 : index
      %49 = vector.load %arg6[%c0_23, %c0_24] : memref<2x128xf32, #tpu.memory_space<vmem>>, vector<2x128xf32>
      tpu.vector_store %arg6[%c0_23, %c0_24], %48 {strides = array<i32>} : memref<2x128xf32, #tpu.memory_space<vmem>>, vector<2x128xf32>,
    } else {
    }
    %c0 = arith.constant 0 : index
    %c0_2 = arith.constant 0 : index
    %c0_3 = arith.constant 0 : index
    %c0_4 = arith.constant 0 : index
    %5 = vector.load %arg3[%c0, %c0_2, %c0_3, %c0_4] : memref<1x1x2x128xf32, #tpu.memory_space<vmem>>, vector<1x1x2x128xf32>
    %6 = vector.shape_cast %5 : vector<1x1x2x128xf32> to vector<2x128xf32>
    %c0_5 = arith.constant 0 : index
    %c0_6 = arith.constant 0 : index
    %c0_7 = arith.constant 0 : index
    %c0_8 = arith.constant 0 : index
    %7 = vector.load %arg4[%c0_5, %c0_6, %c0_7, %c0_8] : memref<1x1x2x128xf32, #tpu.memory_space<vmem>>, vector<1x1x2x128xf32>
    %8 = vector.shape_cast %7 : vector<1x1x2x128xf32> to vector<2x128xf32>
    %9 = math.absf %6 : vector<2x128xf32>
    %cst = arith.constant 0.000000e+00 : f32
    %10 = vector.broadcast %cst : f32 to vector<2x128xf32>
    %11 = arith.subf %10, %9 : vector<2x128xf32>
    %12 = math.exp %11 : vector<2x128xf32>
    %cst_9 = arith.constant 1.000000e+00 : f32
    %13 = vector.broadcast %cst_9 : f32 to vector<2x128xf32>
    %14 = arith.addf %13, %12 : vector<2x128xf32>
    %15 = tpu.reciprocal %14 {approx = true} : vector<2x128xf32> -> vector<2x128xf32>
    %16 = arith.mulf %14, %15 : vector<2x128xf32>
    %cst_10 = arith.constant 2.000000e+00 : f32
    %17 = vector.broadcast %cst_10 : f32 to vector<2x128xf32>
    %18 = arith.subf %17, %16 : vector<2x128xf32>
    %19 = arith.mulf %15, %18 : vector<2x128xf32>
    %cst_11 = arith.constant 0.000000e+00 : f32
    %20 = vector.broadcast %cst_11 : f32 to vector<2x128xf32>
    %21 = arith.cmpf oge, %6, %20 : vector<2x128xf32>
    %cst_12 = arith.constant 1.000000e+00 : f32
    %22 = vector.broadcast %cst_12 : f32 to vector<2x128xf32>
    %23 = arith.subf %22, %19 : vector<2x128xf32>
    %24 = arith.select %21, %19, %23 : vector<2x128xi1>, vector<2x128xf32>
    %cst_13 = arith.constant 0.000000e+00 : f32
    %25 = vector.broadcast %cst_13 : f32 to vector<2x128xf32>
    %26 = arith.maximumf %6, %25 : vector<2x128xf32>
    %27 = arith.mulf %6, %8 : vector<2x128xf32>
    %28 = arith.subf %26, %27 : vector<2x128xf32>
    %29 = math.log1p %12 : vector<2x128xf32>
    %30 = arith.addf %28, %29 : vector<2x128xf32>
    %31 = arith.addf %24, %8 : vector<2x128xf32>
    %cst_14 = arith.constant 2.000000e+00 : f32
    %32 = vector.broadcast %cst_14 : f32 to vector<2x128xf32>
    %33 = arith.mulf %32, %24 : vector<2x128xf32>
    %34 = arith.mulf %33, %8 : vector<2x128xf32>
    %35 = arith.subf %31, %34 : vector<2x128xf32>
    %cst_15 = arith.constant 1.000000e+00 : f32
    %36 = vector.broadcast %cst_15 : f32 to vector<2x128xf32>
    %37 = arith.mulf %36, %35 : vector<2x128xf32>
    %38 = arith.mulf %37, %35 : vector<2x128xf32>
    %39 = arith.mulf %30, %38 : vector<2x128xf32>
    %c0_16 = arith.constant 0 : index
    %c0_17 = arith.constant 0 : index
    %40 = vector.load %arg6[%c0_16, %c0_17] : memref<2x128xf32, #tpu.memory_space<vmem>>, vector<2x128xf32>
    %41 = arith.addf %40, %39 : vector<2x128xf32>
    %c0_18 = arith.constant 0 : index
    %c0_19 = arith.constant 0 : index
    %42 = vector.load %arg6[%c0_18, %c0_19] : memref<2x128xf32, #tpu.memory_space<vmem>>, vector<2x128xf32>
    tpu.vector_store %arg6[%c0_18, %c0_19], %41 {strides = array<i32>} : memref<2x128xf32, #tpu.memory_space<vmem>>, vector<2x128xf32>,
    %c1_i32 = arith.constant 1 : i32
    %43 = arith.cmpi eq, %arg1, %c1_i32 : i32
    %c0_i32_20 = arith.constant 0 : i32
    %44 = arith.cmpi eq, %arg2, %c0_i32_20 : i32
    %45 = arith.andi %43, %44 : i1
    %46 = arith.extui %45 : i1 to i32
    %c0_i32_21 = arith.constant 0 : i32
    %47 = arith.cmpi ne, %46, %c0_i32_21 : i32
    scf.if %47 {
      %c0_22 = arith.constant 0 : index
      %c0_23 = arith.constant 0 : index
      %48 = vector.load %arg6[%c0_22, %c0_23] : memref<2x128xf32, #tpu.memory_space<vmem>>, vector<2x128xf32>
      %cst_24 = arith.constant dense<0.000000e+00> : vector<128xf32>
      %49 = vector.multi_reduction <add>, %48, %cst_24 [0] : vector<2x128xf32> to vector<128xf32>
      %50 = vector.shape_cast %49 : vector<128xf32> to vector<1x128xf32>
      %c0_25 = arith.constant 0 : index
      %c0_26 = arith.constant 0 : index
      %c0_27 = arith.constant 0 : index
      %51 = vector.load %arg5[%c0_25, %c0_26, %c0_27] : memref<1x1x128xf32, #tpu.memory_space<vmem>>, vector<1x1x128xf32>
      %52 = vector.shape_cast %51 : vector<1x1x128xf32> to vector<1x128xf32>
      %53 = vector.shape_cast %50 : vector<1x128xf32> to vector<1x1x128xf32>
      tpu.vector_store %arg5[%c0_25, %c0_26, %c0_27], %53 {strides = array<i32>} : memref<1x1x128xf32, #tpu.memory_space<vmem>>, vector<1x1x128xf32>,
    } else {
    }
    return
  }
  func.func @transform_0(%arg0: i32, %arg1: i32, %arg2: i32) -> (i32, i32, i32, i32) {
    %c0_i32 = arith.constant 0 : i32
    %c0_i32_0 = arith.constant 0 : i32
    return %arg1, %arg0, %arg2, %c0_i32 : i32, i32, i32, i32
  }
  func.func @transform_1(%arg0: i32, %arg1: i32, %arg2: i32) -> (i32, i32, i32, i32) {
    %c0_i32 = arith.constant 0 : i32
    %c0_i32_0 = arith.constant 0 : i32
    return %arg1, %arg0, %arg2, %c0_i32 : i32, i32, i32, i32
  }
  func.func @transform_2(%arg0: i32, %arg1: i32, %arg2: i32) -> (i32, i32, i32) {
    %c0_i32 = arith.constant 0 : i32
    %c0_i32_0 = arith.constant 0 : i32
    %c0_i32_1 = arith.constant 0 : i32
    return %arg0, %c0_i32, %c0_i32_0 : i32, i32, i32
  }
}

</mosaic_0001>

<llo_original>
// kernel: tpu_custom_call.1
$region0: #{tpu_custom_call.1}
  #allocation0 [shape = 'u32[]', space=smem, size = 0x4, offset = 0x4, fixed_abs, tag = 'smem constant byte address 0x4 - core index']
  #allocation1 [shape = 'u32[144,128]{1,0:T(1,128)}', space=vmem, size = 0x12000, scoped, tag = 'internal scratch']
  #allocation2 [shape = 'f32[2,128]{1,0:T(2,128)}', space=vmem, size = 0x400, scoped, tag = 'scratch operand']
  %s0 = inlined_call_operand.hbm [shape: f32[2,4,2,128], index: 0, kind: input, shape index: {}]
  %s1 = inlined_call_operand.hbm [shape: f32[2,4,2,128], index: 1, kind: input, shape index: {}]
  %s2 = inlined_call_operand.hbm [shape: f32[4,1,128], index: 2, kind: output, shape index: {}]
  %s3 = sld [smem:[#allocation0]]
  $region57: #{tpu_custom_call.1} parent=0
    _
  %s5 = ssub.s32 1, %s3
  %s6 = scalar_select 0, %s5, %s3
  $region1: #{tpu_custom_call.1} parent=0
    #allocation3 [shape = 'u8[2048]{0}', space=vmem, size = 0x800, scoped, tag = 'input window, operand 0']
    #allocation4 [shape = 's32[2]{0}', space=sflag, size = 0x8, scoped, tag = 'scoped memory for tpu_custom_call.1']
    #allocation5 [shape = 's32[2]{0}', space=sflag, size = 0x8, scoped, tag = 'scoped memory for tpu_custom_call.1']
    #allocation6 [shape = 'u8[2048]{0}', space=vmem, size = 0x800, scoped, tag = 'input window, operand 1']
    #allocation7 [shape = 's32[2]{0}', space=sflag, size = 0x8, scoped, tag = 'scoped memory for tpu_custom_call.1']
    #allocation8 [shape = 'u8[1024]{0}', space=vmem, size = 0x400, scoped, tag = 'output window, operand 0']
    %7 = vsyncpa [#allocation4], 0
    %s8 = scalar_lea.sflag [#allocation4], 1
    %9 = vsyncpa %s8, 0
    %10 = vsyncpa [#allocation7], 0
    %s11 = scalar_lea.sflag [#allocation7], 1
    %12 = vsyncpa %s11, 0
    %13 = vsyncpa [#allocation5], 0
    %s14 = scalar_lea.sflag [#allocation5], 1
    %15 = vsyncpa %s14, 0
    loop: start=0, step=1, limit=10
    $region2: #{tpu_custom_call.1} parent=1 // loop_pre_header
      _
    $region3: #{tpu_custom_call.1} parent=1 // loop_header
      %s17 = sphi 0, %s21
      %p18 = scmp.ge.s32.totalorder %s17, 10
      %s24 = sphi 0, %s43
      %s25 = sphi 0, %s39
      %s26 = sphi 0, %s35
      %s27 = sphi 0, %s24
      %s28 = sphi 0, %s25
      %s29 = sphi 0, %s26
      %s30 = sphi 0, %s27
      %s31 = sphi 0, %s28
      %s32 = sphi 0, %s29
      %s50 = sphi 0, %s52
      %s53 = sphi 0, %s50
      %s54 = sphi 0, %s53
      %s70 = sphi 0, %s54
      %s80 = sphi 0, %s82
      %s83 = sphi 0, %s80
      %s84 = sphi 0, %s83
      %s100 = sphi 0, %s84
      %s106 = sphi 0, %s108
      %s109 = sphi 0, %s106
      %s110 = sphi 0, %s109
      %s126 = sphi 0, %s110
    $region4: #{tpu_custom_call.1} parent=1 // loop_header_branch
      %20 = sbr.rel (%p18) target = $region8
    $region5: #{tpu_custom_call.1} parent=1 // loop_body
      %s22 = ssub.s32 %s17, 1
      %s23 = ssub.s32 %s17, 2
      %s33 = sadd.s32 1, %s26
      %p34 = scmp.ge.s32.totalorder %s33, 1
      %s35 = scalar_select %p34, 0, %s33
      %s36 = sadd.s32 1, %s25
      %s37 = scalar_select %p34, %s36, %s25
      %p38 = scmp.ge.s32.totalorder %s37, 2
      %s39 = scalar_select %p38, 0, %s37
      %s40 = sadd.s32 1, %s24
      %s41 = scalar_select %p38, %s40, %s24
      %p42 = scmp.ge.s32.totalorder %s41, 4
      %s43 = scalar_select %p42, 0, %s41
      %s44 = ssub.s32 %s25, %s39
      %s45 = ssub.s32 %s24, %s43
      %s46 = sor.u32 %s44, %s45
      %s47 = ssub.s32 %s26, %s35
      %s48 = sor.u32 %s46, %s47
      %p49 = scmp.eq.s32.totalorder %s48, 0
      %s51 = sadd.s32 %s50, 1
      %s52 = scalar_select %p49, %s50, %s51
      %p55 = pneg %p49
      %p56 = scmp.eq.s32.totalorder %s17, 7
      %p57 = por %p55, %p56
      %p58 = scmp.ne.s32.totalorder %s50, %s53
      %p59 = scmp.eq.s32.totalorder %s17, 0
      %p60 = por %p58, %p59
      %p61 = scmp.ne.s32.totalorder %s50, %s53
      %p62 = scmp.eq.s32.totalorder %s22, 7
      %p63 = por %p61, %p62
      %p64 = scmp.ne.s32.totalorder %s53, %s54
      %p65 = scmp.eq.s32.totalorder %s22, 0
      %p66 = por %p64, %p65
      %p67 = scmp.ne.s32.totalorder %s53, %s54
      %p68 = scmp.eq.s32.totalorder %s23, 7
      %p69 = por %p67, %p68
      %p71 = scmp.ne.s32.totalorder %s54, %s70
      %p72 = scmp.eq.s32.totalorder %s23, 0
      %p73 = por %p71, %p72
      %s74 = ssub.s32 %s25, %s39
      %s75 = ssub.s32 %s24, %s43
      %s76 = sor.u32 %s74, %s75
      %s77 = ssub.s32 %s26, %s35
      %s78 = sor.u32 %s76, %s77
      %p79 = scmp.eq.s32.totalorder %s78, 0
      %s81 = sadd.s32 %s80, 1
      %s82 = scalar_select %p79, %s80, %s81
      %p85 = pneg %p79
      %p86 = scmp.eq.s32.totalorder %s17, 7
      %p87 = por %p85, %p86
      %p88 = scmp.ne.s32.totalorder %s80, %s83
      %p89 = scmp.eq.s32.totalorder %s17, 0
      %p90 = por %p88, %p89
      %p91 = scmp.ne.s32.totalorder %s80, %s83
      %p92 = scmp.eq.s32.totalorder %s22, 7
      %p93 = por %p91, %p92
      %p94 = scmp.ne.s32.totalorder %s83, %s84
      %p95 = scmp.eq.s32.totalorder %s22, 0
      %p96 = por %p94, %p95
      %p97 = scmp.ne.s32.totalorder %s83, %s84
      %p98 = scmp.eq.s32.totalorder %s23, 7
      %p99 = por %p97, %p98
      %p101 = scmp.ne.s32.totalorder %s84, %s100
      %p102 = scmp.eq.s32.totalorder %s23, 0
      %p103 = por %p101, %p102
      %s104 = ssub.s32 %s24, %s43
      %p105 = scmp.eq.s32.totalorder %s104, 0
      %s107 = sadd.s32 %s106, 1
      %s108 = scalar_select %p105, %s106, %s107
      %p111 = pneg %p105
      %p112 = scmp.eq.s32.totalorder %s17, 7
      %p113 = por %p111, %p112
      %p114 = scmp.ne.s32.totalorder %s106, %s109
      %p115 = scmp.eq.s32.totalorder %s17, 0
      %p116 = por %p114, %p115
      %p117 = scmp.ne.s32.totalorder %s106, %s109
      %p118 = scmp.eq.s32.totalorder %s22, 7
      %p119 = por %p117, %p118
      %p120 = scmp.ne.s32.totalorder %s109, %s110
      %p121 = scmp.eq.s32.totalorder %s22, 0
      %p122 = por %p120, %p121
      %p123 = scmp.ne.s32.totalorder %s109, %s110
      %p124 = scmp.eq.s32.totalorder %s23, 7
      %p125 = por %p123, %p124
      %p127 = scmp.ne.s32.totalorder %s110, %s126
      %p128 = scmp.eq.s32.totalorder %s23, 0
      %p129 = por %p127, %p128
      %p130 = scmp.le.s32.totalorder 1, %s17
      %p131 = scmp.lt.s32.totalorder %s17, 9
      %p132 = pnand %p130, %p131
      %p133 = pneg %p132
      // Predicated region
      $region9: #{tpu_custom_call.1} parent=5 // pred_check
        _
      $region10: #{tpu_custom_call.1} parent=5 // pred_check_branch
        %135 = sbr.rel (%p132) target = $region12
      $region11: #{tpu_custom_call.1} parent=5 // pred_region
        %s136 = ssub.s32 %s17, 1
      $region12: #{tpu_custom_call.1} parent=5 // pred_fallthru
        _
      %p137 = scmp.lt.s32.totalorder %s17, 8
      // Predicated region
      $region13: #{tpu_custom_call.1} parent=5 // pred_check
        %p138 = pneg %p137
      $region14: #{tpu_custom_call.1} parent=5 // pred_check_branch
        %140 = sbr.rel (%p138) target = $region16
      $region15: #{tpu_custom_call.1} parent=5 // pred_region
        // Predicated region
        $region17: #{tpu_custom_call.1} parent=15 // pred_check
          %p141 = pneg %p60
        $region18: #{tpu_custom_call.1} parent=15 // pred_check_branch
          %143 = sbr.rel (%p141) target = $region20
        $region19: #{tpu_custom_call.1} parent=15 // pred_region
          %s144 = sand.u32 %s50, 1
          %s145 = scalar_lea.sflag [#allocation4], %s144
          %s146 = sand.u32 %s50, 1
          %s147 = smul.addr %s146, 2
          %s148 = scalar_lea.vmem [#allocation3], %s147
          %s150 = ssub.s32 32, 32
          %151 = vsyncadd %s145, %s150
          %s152 = sadd.s32 %s26, %s24
          %s153 = smul.addr %s25, 4
          %s154 = sadd.s32 %s152, %s153
          %s155 = smul.addr %s154, 32
          %s156 = scalar_lea.hbm %s0, %s155
          %s158 = sshll.u32 %s148, 4
          %s159 = int_to_ptr.vmem [resolvable:$true] %s158
          %161 = dma.hbm_to_vmem [thread:$0]  %s156, 32, %s159, %s145
        $region20: #{tpu_custom_call.1} parent=15 // pred_fallthru
          _
        // Predicated region
        $region21: #{tpu_custom_call.1} parent=15 // pred_check
          %p162 = pneg %p90
        $region22: #{tpu_custom_call.1} parent=15 // pred_check_branch
          %164 = sbr.rel (%p162) target = $region24
        $region23: #{tpu_custom_call.1} parent=15 // pred_region
          %s165 = sand.u32 %s80, 1
          %s166 = scalar_lea.sflag [#allocation7], %s165
          %s167 = sand.u32 %s80, 1
          %s168 = smul.addr %s167, 2
          %s169 = scalar_lea.vmem [#allocation6], %s168
          %s171 = ssub.s32 32, 32
          %172 = vsyncadd %s166, %s171
          %s173 = sadd.s32 %s26, %s24
          %s174 = smul.addr %s25, 4
          %s175 = sadd.s32 %s173, %s174
          %s176 = smul.addr %s175, 32
          %s177 = scalar_lea.hbm %s1, %s176
          %s179 = sshll.u32 %s169, 4
          %s180 = int_to_ptr.vmem [resolvable:$true] %s179
          %182 = dma.hbm_to_vmem [thread:$0]  %s177, 32, %s180, %s166
        $region24: #{tpu_custom_call.1} parent=15 // pred_fallthru
          _
      $region16: #{tpu_custom_call.1} parent=5 // pred_fallthru
        _
      %p183 = scmp.le.s32.totalorder 1, %s17
      %p184 = scmp.lt.s32.totalorder %s17, 9
      %p185 = pnand %p183, %p184
      %p186 = pneg %p185
      // Predicated region
      $region25: #{tpu_custom_call.1} parent=5 // pred_check
        _
      $region26: #{tpu_custom_call.1} parent=5 // pred_check_branch
        %188 = sbr.rel (%p185) target = $region28
      $region27: #{tpu_custom_call.1} parent=5 // pred_region
        %s189 = ssub.s32 %s17, 1
        %s190 = sand.u32 %s53, 1
        %s191 = scalar_lea.sflag [#allocation4], %s190
        %s192 = sand.u32 %s53, 1
        %s193 = smul.addr %s192, 2
        %s194 = scalar_lea.vmem [#allocation3], %s193
        // Predicated region
        $region29: #{tpu_custom_call.1} parent=27 // pred_check
          %p195 = pneg %p66
        $region30: #{tpu_custom_call.1} parent=27 // pred_check_branch
          %197 = sbr.rel (%p195) target = $region32
        $region31: #{tpu_custom_call.1} parent=27 // pred_region
          %198 = dma.done %s191, 32
        $region32: #{tpu_custom_call.1} parent=27 // pred_fallthru
          _
        %s199 = sand.u32 %s83, 1
        %s200 = scalar_lea.sflag [#allocation7], %s199
        %s201 = sand.u32 %s83, 1
        %s202 = smul.addr %s201, 2
        %s203 = scalar_lea.vmem [#allocation6], %s202
        // Predicated region
        $region33: #{tpu_custom_call.1} parent=27 // pred_check
          %p204 = pneg %p96
        $region34: #{tpu_custom_call.1} parent=27 // pred_check_branch
          %206 = sbr.rel (%p204) target = $region36
        $region35: #{tpu_custom_call.1} parent=27 // pred_region
          %207 = dma.done %s200, 32
        $region36: #{tpu_custom_call.1} parent=27 // pred_fallthru
          _
        %s208 = sand.u32 %s53, 1
        %s209 = scalar_lea.sflag [#allocation4], %s208
        %s210 = sand.u32 %s53, 1
        %s211 = smul.addr %s210, 2
        %s212 = scalar_lea.vmem [#allocation3], %s211
        %p213 = pneg %p66
        %p214 = pneg %p63
        %s215 = sand.u32 %s83, 1
        %s216 = scalar_lea.sflag [#allocation7], %s215
        %s217 = sand.u32 %s83, 1
        %s218 = smul.addr %s217, 2
        %s219 = scalar_lea.vmem [#allocation6], %s218
        %p220 = pneg %p96
        %p221 = pneg %p93
        %p222 = pneg %p122
        %p223 = pneg %p119
        %s224 = sand.u32 %s109, 1
        %s225 = scalar_lea.sflag [#allocation5], %s224
        %s226 = sand.u32 %s109, 1
        %s227 = scalar_lea.vmem [#allocation8], %s226
        %p228 = scmp.eq.s32.totalorder %s28, 0
        %p229 = scmp.eq.s32.totalorder %s29, 0
        %p230 = pnand %p228, %p229
        %p231 = pneg %p230
        // Predicated region
        $region37: #{tpu_custom_call.1} parent=27 // pred_check
          _
        $region38: #{tpu_custom_call.1} parent=27 // pred_check_branch
          %233 = sbr.rel (%p230) target = $region40
        $region39: #{tpu_custom_call.1} parent=27 // pred_region
          %234 = vst [vmem:[#allocation2] sm:$0x3] 0.0
        $region40: #{tpu_custom_call.1} parent=27 // pred_fallthru
          _
        %v235 = vld [vmem:[%s194] sm:$0x3]
        %v236 = vld [vmem:[%s203] sm:$0x3]
        %v237 = vand.u32 2147483647, %v235
        %v238 = vsub.f32 0.0, %v237
        %v239 = vmul.f32 %v238, 1.442695
        %v240 = vpow.pop %v239
        %v241 = vadd.f32 %v240, 1.0
        %v242 = vrcp.pop %v241
        %v243 = vmul.f32 %v241, %v242
        %v244 = vsub.f32 2.0, %v243
        %v245 = vmul.f32 %v242, %v244
        %vm246 = vcmp.ge.f32.partialorder %v235, 0.0
        %v247 = vsub.f32 1.0, %v245
        %v248 = vsel %vm246, %v245, %v247
        %v249 = vmax.f32 %v235, 0.0
        %v250 = vmul.f32 %v235, %v236
        %v251 = vsub.f32 %v249, %v250
        %v252 = vadd.f32 %v240, 1.0
        %v253 = vlog2.pop %v252
        %v254 = vmul.f32 %v253, 0.6931472
        %v255 = vmul.f32 -0.5, %v240
        %v256 = vadd.f32 %v255, 1.0
        %v257 = vmul.f32 %v256, %v240
        %v258 = vand.u32 2147483647, %v240
        %vm259 = vcmp.lt.f32.partialorder %v258, 0.0004427343
        %v260 = vsel %vm259, %v257, %v254
        %v261 = vadd.f32 %v251, %v260
        %v262 = vadd.f32 %v248, %v236
        %v263 = vmul.f32 %v248, 2.0
        %v264 = vmul.f32 %v263, %v236
        %v265 = vsub.f32 %v262, %v264
        %v266 = vmul.f32 %v265, %v265
        %v267 = vmul.f32 %v261, %v266
        %v268 = vld [vmem:[#allocation2] sm:$0x3]
        %v269 = vadd.f32 %v268, %v267
        %270 = vst [vmem:[#allocation2] sm:$0x3] %v269
        %p271 = scmp.eq.s32.totalorder %s28, 1
        %p272 = pnand %p271, %p229
        %p273 = pneg %p272
        // Predicated region
        $region41: #{tpu_custom_call.1} parent=27 // pred_check
          _
        $region42: #{tpu_custom_call.1} parent=27 // pred_check_branch
          %275 = sbr.rel (%p272) target = $region44
        $region43: #{tpu_custom_call.1} parent=27 // pred_region
          %v276 = vld [vmem:[#allocation2] sm:$0x3]
          %vm277 = vcmask 1041408
          %v278 = vsel %vm277, %v276, 0.0
          %v279 = vrot.slane %v278, 4
          %v280 = vadd.f32 %v278, %v279
          %v281 = vrot.slane %v280, 2
          %v282 = vadd.f32 %v280, %v281
          %v283 = vrot.slane %v282, 1
          %v284 = vadd.f32 %v282, %v283
          %285 = vst [vmem:[%s227] sm:$0x1] %v284
        $region44: #{tpu_custom_call.1} parent=27 // pred_fallthru
          _
        %s286 = sand.u32 %s109, 1
        %s287 = scalar_lea.sflag [#allocation5], %s286
        %s288 = sand.u32 %s109, 1
        %s289 = scalar_lea.vmem [#allocation8], %s288
        // Predicated region
        $region45: #{tpu_custom_call.1} parent=27 // pred_check
          %p290 = pneg %p119
        $region46: #{tpu_custom_call.1} parent=27 // pred_check_branch
          %292 = sbr.rel (%p290) target = $region48
        $region47: #{tpu_custom_call.1} parent=27 // pred_region
          %s294 = ssub.s32 16, 16
          %295 = vsyncadd %s287, %s294
          %s296 = smul.addr %s27, 16
          %s297 = scalar_lea.hbm %s2, %s296
          %s299 = sshll.u32 %s289, 4
          %s300 = int_to_ptr.vmem [resolvable:$true] %s299
          %302 = dma.vmem_to_hbm [thread:$0]  %s300, 16, %s297, %s287
        $region48: #{tpu_custom_call.1} parent=27 // pred_fallthru
          _
      $region28: #{tpu_custom_call.1} parent=5 // pred_fallthru
        _
      %p303 = scmp.le.s32.totalorder 2, %s17
      // Predicated region
      $region49: #{tpu_custom_call.1} parent=5 // pred_check
        %p304 = pneg %p303
      $region50: #{tpu_custom_call.1} parent=5 // pred_check_branch
        %306 = sbr.rel (%p304) target = $region52
      $region51: #{tpu_custom_call.1} parent=5 // pred_region
        %s307 = ssub.s32 %s17, 2
        // Predicated region
        $region53: #{tpu_custom_call.1} parent=51 // pred_check
          %p308 = pneg %p125
        $region54: #{tpu_custom_call.1} parent=51 // pred_check_branch
          %310 = sbr.rel (%p308) target = $region56
        $region55: #{tpu_custom_call.1} parent=51 // pred_region
          %s311 = sand.u32 %s110, 1
          %s312 = scalar_lea.sflag [#allocation5], %s311
          %s313 = sand.u32 %s110, 1
          %s314 = scalar_lea.vmem [#allocation8], %s313
          %315 = dma.done %s312, 16
        $region56: #{tpu_custom_call.1} parent=51 // pred_fallthru
          _
      $region52: #{tpu_custom_call.1} parent=5 // pred_fallthru
        _
    $region6: #{tpu_custom_call.1} parent=1 // loop_footer
      %s21 = sadd.s32 1, %s17
    $region7: #{tpu_custom_call.1} parent=1 // loop_footer_branch
      %16 = sbr.rel target = $region3
    $region8: #{tpu_custom_call.1} parent=1 // loop_exit
      _
    %316 = vsyncpa [#allocation4], 1
    %s317 = scalar_lea.sflag [#allocation4], 1
    %318 = vsyncpa %s317, 1
    %319 = vsyncpa [#allocation7], 1
    %s320 = scalar_lea.sflag [#allocation7], 1
    %321 = vsyncpa %s320, 1
    %322 = vsyncpa [#allocation5], 1
    %s323 = scalar_lea.sflag [#allocation5], 1
    %324 = vsyncpa %s323, 1

</llo_original>
